<compile_context>
chip_gen: v7x
topology: tpu7x:2x2x1
jax: 0.10.0
libtpu: 0.0.40
codegen_flags: <defaults>
</compile_context>

<pallas_src>
import functools

import jax
import jax.numpy as jnp
from jax import lax
from jax.experimental import pallas as pl
from jax.experimental.pallas import tpu as pltpu


def _round_up(x: int, m: int) -> int:
    return ((x + m - 1) // m) * m


def _min_pool_kernel(x_ref, mask_ref, out_ref, *, seq_len: int, need_guard: bool):
    # x_ref:    (TB, TS, TH)  activations tile (seq -> sublanes, hidden -> lanes)
    # mask_ref: (TB, TS, 1)   int8 tile (nonzero = keep)
    # out_ref:  (TB, TH)      running-min accumulator, VMEM-resident across the S axis
    s = pl.program_id(2)

    @pl.when(s == 0)
    def _():
        out_ref[...] = jnp.full(out_ref.shape, jnp.inf, dtype=out_ref.dtype)

    keep = mask_ref[...].astype(jnp.int32) != 0           # (TB, TS, 1)
    if need_guard:
        # Ragged S tail: positions >= seq_len in the edge block hold stale VMEM
        # (both in x and in the mask) and must never enter the min.
        ts = mask_ref.shape[1]
        offs = s * ts + lax.broadcasted_iota(jnp.int32, mask_ref.shape, 1)
        keep = keep & (offs < seq_len)

    x = x_ref[...]                                         # (TB, TS, TH)
    sentinel = jnp.array(jnp.inf, dtype=x.dtype)
    masked = jnp.where(keep, x, sentinel)                  # masked_fill(~mask, +inf)
    tile_min = jnp.min(masked, axis=1)                     # (TB, TH): sublane reduce
    out_ref[...] = jnp.minimum(out_ref[...], tile_min.astype(out_ref.dtype))


def min_pooling(last_hidden_state: jax.Array,
                attention_mask: jax.Array,
                *,
                seq_tile_bytes: int = 8 * 1024 * 1024) -> jax.Array:
    """last_hidden_state: [B, S, H] float, attention_mask: [B, S] bool -> [B, H]."""
    B, S, H = last_hidden_state.shape
    dtype = last_hidden_state.dtype
    # TODO(synk): integer inputs would need a dtype-max sentinel instead of +inf.
    assert jnp.issubdtype(dtype, jnp.floating), "MinPooling kernel expects float inputs"
    itemsize = jnp.dtype(dtype).itemsize
    sub = {4: 8, 2: 16, 1: 32}.get(itemsize, 8)            # native sublane multiple

    # ---- batch tile --------------------------------------------------------
    TB = 8 if B >= 8 else B                                 # sublane-aligned output rows
    nb = pl.cdiv(B, TB)

    # ---- hidden tile -------------------------------------------------------
    TH = H
    # Huge-H guard: the minimum x tile (TB, sub, TH) must fit one buffer.
    max_th = max(128, (seq_tile_bytes // max(1, TB * sub * itemsize)) // 128 * 128)
    if TH > max_th:
        TH = max_th
    # Megacore: with a single batch block, split H so both v7x TensorCores get work.
    if nb < 2 and H >= 256:
        TH = min(TH, _round_up(pl.cdiv(H, 2), 128))
    nh = pl.cdiv(H, TH)
    th_lanes = _round_up(min(TH, H), 128)                   # lane-padded width in VMEM

    # ---- sequence tile -----------------------------------------------------
    ts_budget = max(sub, seq_tile_bytes // max(1, TB * th_lanes * itemsize))
    TS = min(S, ts_budget)
    if TS < S:
        # Layout-friendly multiple: 32 covers f32/bf16 activations and the i8 mask.
        m = 32 if TS >= 32 else sub
        TS = max(sub, (TS // m) * m)
    ns = pl.cdiv(S, TS)
    need_guard = (S % TS) != 0

    # ---- VMEM budget (double-buffered inputs + output accumulator) ---------
    x_buf = TB * _round_up(TS, sub) * th_lanes * itemsize
    mask_buf = TB * _round_up(TS, 32) * 128                 # int8, lane dim padded to 128
    out_buf = _round_up(TB, 8) * th_lanes * itemsize
    vmem_bytes = 2 * (x_buf + mask_buf + out_buf) + (2 << 20)
    vmem_limit = int(min(max(vmem_bytes, 8 << 20), 64 << 20))

    # Mask: int8, S on sublanes (last dim 1) -> cheap lane broadcast over H in-kernel.
    mask3d = attention_mask.astype(jnp.int8)[:, :, None]    # (B, S, 1)

    grid = (nb, nh, ns)

    cost = pl.CostEstimate(
        flops=2 * B * S * H,                                 # compare/select per element
        transcendentals=0,
        bytes_accessed=(B * S * H * itemsize                 # activations
                        + B * S                              # int8 mask
                        + B * H * itemsize),                 # output
    )

    kernel = functools.partial(_min_pool_kernel, seq_len=S, need_guard=need_guard)

    out = pl.pallas_call(
        kernel,
        out_shape=jax.ShapeDtypeStruct((B, H), dtype),
        grid_spec=pltpu.PrefetchScalarGridSpec(
            num_scalar_prefetch=0,
            grid=grid,
            in_specs=[
                pl.BlockSpec((TB, TS, TH), lambda b, h, s: (b, s, h)),
                pl.BlockSpec((TB, TS, 1), lambda b, h, s: (b, s, 0)),
            ],
            # Same block index across the S axis -> VMEM-resident accumulator.
            out_specs=pl.BlockSpec((TB, TH), lambda b, h, s: (b, h)),
        ),
        compiler_params=pltpu.CompilerParams(
            dimension_semantics=("parallel", "parallel", "arbitrary"),
            vmem_limit_bytes=vmem_limit,
        ),
        cost_estimate=cost,
    )(last_hidden_state, mask3d)
    return out


def min_pooling_ref(last_hidden_state, attention_mask):
    # Pure-JAX reference (matches PyTorch masked_fill(+inf) + min over dim=1).
    keep = attention_mask[..., None]
    masked = jnp.where(keep, last_hidden_state, jnp.inf)
    return jnp.min(masked, axis=1)


if __name__ == "__main__":
    key = jax.random.PRNGKey(0)
    k1, k2, k3 = jax.random.split(key, 3)

    # --- primary small case (matches module spec) ---------------------------
    B, S, H = 2, 8, 32
    last_hidden_state = jax.random.normal(k1, (B, S, H), dtype=jnp.float32)
    lengths = jnp.array([5, 3], dtype=jnp.int32)
    attention_mask = jnp.arange(S)[None, :] < lengths[:, None]      # [B, S] bool

    out = jax.block_until_ready(min_pooling(last_hidden_state, attention_mask))
    ref = min_pooling_ref(last_hidden_state, attention_mask)
    assert out.shape == (B, H)
    assert jnp.allclose(out, ref, atol=1e-6), "mismatch vs reference (small case)"

    # --- case exercising ragged S guard + partial batch block + empty row ---
    B2, S2, H2 = 10, 40, 160
    x2 = jax.random.normal(k2, (B2, S2, H2), dtype=jnp.float32)
    lengths2 = jnp.array([40, 17, 1, 33, 8, 0, 25, 40, 3, 39], dtype=jnp.int32)
    mask2 = jnp.arange(S2)[None, :] < lengths2[:, None]
    # Tiny seq_tile_bytes forces TS=32 -> 2 sequence tiles, ragged tail of 8.
    out2 = jax.block_until_ready(
        min_pooling(x2, mask2, seq_tile_bytes=8 * 256 * 4 * 32))
    ref2 = min_pooling_ref(x2, mask2)
    assert out2.shape == (B2, H2)
    assert jnp.allclose(out2, ref2, atol=1e-6), "mismatch vs reference (ragged case)"

    # --- bf16 case exercising the hidden-axis (megacore) split --------------
    B3, S3, H3 = 3, 50, 512
    x3 = jax.random.normal(k3, (B3, S3, H3), dtype=jnp.bfloat16)
    lengths3 = jnp.array([50, 7, 23], dtype=jnp.int32)
    mask3 = jnp.arange(S3)[None, :] < lengths3[:, None]
    out3 = jax.block_until_ready(
        min_pooling(x3, mask3, seq_tile_bytes=3 * 256 * 2 * 32))
    ref3 = min_pooling_ref(x3, mask3)
    assert out3.shape == (B3, H3)
    assert jnp.allclose(out3.astype(jnp.float32), ref3.astype(jnp.float32)), \
        "mismatch vs reference (bf16 / H-split case)"

    print("KERNEL_OK")
</pallas_src>

<mosaic_0001>
module attributes {stable_mosaic.version = 11 : i64} {
  func.func @_min_pool_kernel(%arg0: i32, %arg1: i32, %arg2: i32, %arg3: memref<2x8x32xf32, #tpu.memory_space<vmem>>, %arg4: memref<2x8x1xi8, #tpu.memory_space<vmem>>, %arg5: memref<2x32xf32, #tpu.memory_space<vmem>>) attributes {dimension_semantics = [#tpu.dimension_semantics<parallel>, #tpu.dimension_semantics<parallel>, #tpu.dimension_semantics<arbitrary>], iteration_bounds = array<i64: 1, 1, 1>, scalar_prefetch = 0 : i64, scratch_operands = 0 : i64, tpu.core_type = #tpu.core_type<tc>, window_params = [{transform_indices = @transform_0, window_bounds = array<i64: 2, 8, 32>}, {transform_indices = @transform_1, window_bounds = array<i64: 2, 8, 1>}, {transform_indices = @transform_2, window_bounds = array<i64: 2, 32>}]} {
    %c0_i32 = arith.constant 0 : i32
    %0 = arith.cmpi eq, %arg2, %c0_i32 : i32
    %1 = arith.extui %0 : i1 to i32
    %c0_i32_0 = arith.constant 0 : i32
    %2 = arith.cmpi ne, %1, %c0_i32_0 : i32
    scf.if %2 {
      %cst_12 = arith.constant 0x7F800000 : f32
      %16 = vector.broadcast %cst_12 : f32 to vector<2x32xf32>
      %c0_13 = arith.constant 0 : index
      %c0_14 = arith.constant 0 : index
      %17 = vector.load %arg5[%c0_13, %c0_14] : memref<2x32xf32, #tpu.memory_space<vmem>>, vector<2x32xf32>
      tpu.vector_store %arg5[%c0_13, %c0_14], %16 {strides = array<i32>} : memref<2x32xf32, #tpu.memory_space<vmem>>, vector<2x32xf32>,
    } else {
    }
    %c0 = arith.constant 0 : index
    %c0_1 = arith.constant 0 : index
    %c0_2 = arith.constant 0 : index
    %3 = vector.load %arg4[%c0, %c0_1, %c0_2] : memref<2x8x1xi8, #tpu.memory_space<vmem>>, vector<2x8x1xi8>
    %4 = arith.extsi %3 : vector<2x8x1xi8> to vector<2x8x1xi32>
    %c0_i32_3 = arith.constant 0 : i32
    %5 = vector.broadcast %c0_i32_3 : i32 to vector<2x8x1xi32>
    %6 = arith.cmpi ne, %4, %5 : vector<2x8x1xi32>
    %c0_4 = arith.constant 0 : index
    %c0_5 = arith.constant 0 : index
    %c0_6 = arith.constant 0 : index
    %7 = vector.load %arg3[%c0_4, %c0_5, %c0_6] : memref<2x8x32xf32, #tpu.memory_space<vmem>>, vector<2x8x32xf32>
    %cst = arith.constant 0x7F800000 : f32
    %8 = vector.shape_cast %6 : vector<2x8x1xi1> to vector<2x8x1xi1>
    %9 = vector.broadcast %8 : vector<2x8x1xi1> to vector<2x8x32xi1>
    %10 = vector.broadcast %cst : f32 to vector<2x8x32xf32>
    %11 = arith.select %9, %7, %10 : vector<2x8x32xi1>, vector<2x8x32xf32>
    %cst_7 = arith.constant dense<0x7F800000> : vector<2x32xf32>
    %12 = vector.multi_reduction <minimumf>, %11, %cst_7 [1] : vector<2x8x32xf32> to vector<2x32xf32>
    %c0_8 = arith.constant 0 : index
    %c0_9 = arith.constant 0 : index
    %13 = vector.load %arg5[%c0_8, %c0_9] : memref<2x32xf32, #tpu.memory_space<vmem>>, vector<2x32xf32>
    %14 = arith.minimumf %13, %12 : vector<2x32xf32>
    %c0_10 = arith.constant 0 : index
    %c0_11 = arith.constant 0 : index
    %15 = vector.load %arg5[%c0_10, %c0_11] : memref<2x32xf32, #tpu.memory_space<vmem>>, vector<2x32xf32>
    tpu.vector_store %arg5[%c0_10, %c0_11], %14 {strides = array<i32>} : memref<2x32xf32, #tpu.memory_space<vmem>>, vector<2x32xf32>,
    return
  }
  func.func @transform_0(%arg0: i32, %arg1: i32, %arg2: i32) -> (i32, i32, i32) {
    %c0_i32 = arith.constant 0 : i32
    return %arg0, %arg2, %arg1 : i32, i32, i32
  }
  func.func @transform_1(%arg0: i32, %arg1: i32, %arg2: i32) -> (i32, i32, i32) {
    %c0_i32 = arith.constant 0 : i32
    %c0_i32_0 = arith.constant 0 : i32
    return %arg0, %arg2, %c0_i32 : i32, i32, i32
  }
  func.func @transform_2(%arg0: i32, %arg1: i32, %arg2: i32) -> (i32, i32) {
    %c0_i32 = arith.constant 0 : i32
    return %arg0, %arg1 : i32, i32
  }
}

</mosaic_0001>

<llo_original>
// kernel: tpu_custom_call.1
$region0: #{tpu_custom_call.1}
  #allocation0 [shape = 'u32[]', space=smem, size = 0x4, offset = 0x4, fixed_abs, tag = 'smem constant byte address 0x4 - core index']
  #allocation1 [shape = 'u32[144,128]{1,0:T(1,128)}', space=vmem, size = 0x12000, scoped, tag = 'internal scratch']
  %s0 = inlined_call_operand.hbm [shape: f32[2,8,32], index: 0, kind: input, shape index: {}]
  %s1 = inlined_call_operand.vmem [shape: s8[2,8,1], index: 1, kind: input, shape index: {}]
  %s2 = inlined_call_operand.hbm [shape: f32[2,32], index: 2, kind: output, shape index: {}]
  %s3 = sld [smem:[#allocation0]]
  $region26: #{tpu_custom_call.1} parent=0
    _
  %s5 = ssub.s32 1, %s3
  %s6 = scalar_select 0, %s5, %s3
  $region1: #{tpu_custom_call.1} parent=0
    #allocation2 [shape = 'u8[8192]{0}', space=vmem, size = 0x2000, scoped, tag = 'input window, operand 0, single buffered']
    #allocation3 [shape = 's32[1]{0}', space=sflag, size = 0x4, scoped, tag = 'scoped memory for tpu_custom_call.1']
    #allocation4 [shape = 's32[1]{0}', space=sflag, size = 0x4, scoped, tag = 'scoped memory for tpu_custom_call.1']
    #allocation5 [shape = 'u8[1024]{0}', space=vmem, size = 0x400, scoped, tag = 'output window, operand 0, single buffered']
    %7 = vsyncpa [#allocation3], 0
    %8 = vsyncpa [#allocation4], 0
    // Predicated region
    $region2: #{tpu_custom_call.1} parent=1 // pred_check
      _
    $region3: #{tpu_custom_call.1} parent=1 // pred_check_branch
      %10 = sbr.rel (0) target = $region5
    $region4: #{tpu_custom_call.1} parent=1 // pred_region
      %s12 = ssub.s32 256, 256
      %13 = vsyncadd [#allocation3], %s12
      %s14 = sshll.u32 [#allocation2], 4
      %s15 = int_to_ptr.vmem [resolvable:$true] %s14
      %20 = dma.hbm_to_vmem [thread:$0]  %s0, 256, %s15, [#allocation3], 128, 128, 8
    $region5: #{tpu_custom_call.1} parent=1 // pred_fallthru
      _
    // Predicated region
    $region6: #{tpu_custom_call.1} parent=1 // pred_check
      _
    $region7: #{tpu_custom_call.1} parent=1 // pred_check_branch
      %22 = sbr.rel (0) target = $region9
    $region8: #{tpu_custom_call.1} parent=1 // pred_region
      _
    $region9: #{tpu_custom_call.1} parent=1 // pred_fallthru
      _
    // Predicated region
    $region10: #{tpu_custom_call.1} parent=1 // pred_check
      _
    $region11: #{tpu_custom_call.1} parent=1 // pred_check_branch
      %24 = sbr.rel (0) target = $region13
    $region12: #{tpu_custom_call.1} parent=1 // pred_region
      %25 = dma.done [#allocation3], 256
    $region13: #{tpu_custom_call.1} parent=1 // pred_fallthru
      _
    %p26 = scmp.eq.s32.totalorder 0, 0
    // Predicated region
    $region14: #{tpu_custom_call.1} parent=1 // pred_check
      %p27 = pneg %p26
    $region15: #{tpu_custom_call.1} parent=1 // pred_check_branch
      %29 = sbr.rel (%p27) target = $region17
    $region16: #{tpu_custom_call.1} parent=1 // pred_region
      %vm30 = vcmask 254976
      %31 = vst.msk [vmem:[#allocation5] sm:$0x3] %vm30, inf
    $region17: #{tpu_custom_call.1} parent=1 // pred_fallthru
      _
    %v32 = vld [vmem:[%s1] sm:$0x3]
    %v33 = vld [vmem:[%s1 + $0x2] sm:$0x3]
    %v34 = vunpack.c.0.s8 %v32
    %v35 = vunpack.c.0.s8 %v33
    %vm36 = vcmp.ne.s32.totalorder %v34, 0
    %vm37 = vcmp.ne.s32.totalorder %v35, 0
    %v38 = vld [vmem:[#allocation2] sm:$0xff]
    %v39 = vld [vmem:[#allocation2 + $0x8] sm:$0xff]
    %v40 = vsel %vm36, 1, 0
    %v41 = vsel %vm37, 1, 0
    %42 = vset.pattern.permute.xlu0 0
    %43 = vperm.xlu0 %42, %v40
    %v44 = vpop.permute.xlu0 %43
    %45 = vset.pattern.permute.xlu0 0
    %46 = vperm.xlu0 %45, %v41
    %v47 = vpop.permute.xlu0 %46
    %vm48 = vcmp.eq.s32.totalorder %v44, 1
    %vm49 = vcmp.eq.s32.totalorder %v47, 1
    %v50 = vsel %vm48, %v38, inf
    %v51 = vsel %vm49, %v39, inf
    %vm52 = vcmask 261120
    %v53 = vsel %vm52, %v50, inf
    %v54 = vrot.slane %v53, 4
    %v55 = vmin.f32 %v53, %v54
    %v56 = vrot.slane %v55, 2
    %v57 = vmin.f32 %v55, %v56
    %v58 = vrot.slane %v57, 1
    %v59 = vmin.f32 %v57, %v58
    %v60 = vsel %vm52, %v51, inf
    %v61 = vrot.slane %v60, 4
    %v62 = vmin.f32 %v60, %v61
    %v63 = vrot.slane %v62, 2
    %v64 = vmin.f32 %v62, %v63
    %v65 = vrot.slane %v64, 1
    %v66 = vmin.f32 %v64, %v65
    %v67 = vld [vmem:[#allocation5] sm:$0x3]
    %vm70 = vcmask 1041409
    %v71 = vsel %vm70, %v66, %v59
    %v73 = vmin.f32 %v67, %v71
    %vm74 = vcmask 254976
    %75 = vst.msk [vmem:[#allocation5] sm:$0x3] %vm74, %v73
    // Predicated region
    $region18: #{tpu_custom_call.1} parent=1 // pred_check
      _
    $region19: #{tpu_custom_call.1} parent=1 // pred_check_branch
      %77 = sbr.rel (0) target = $region21
    $region20: #{tpu_custom_call.1} parent=1 // pred_region
      %s79 = ssub.s32 32, 32
      %80 = vsyncadd [#allocation4], %s79
      %s82 = sshll.u32 [#allocation5], 4
      %s83 = int_to_ptr.vmem [resolvable:$true] %s82
      %85 = dma.vmem_to_hbm [thread:$0]  %s83, 32, %s2, [#allocation4]
    $region21: #{tpu_custom_call.1} parent=1 // pred_fallthru
      _
    // Predicated region
    $region22: #{tpu_custom_call.1} parent=1 // pred_check
      _
    $region23: #{tpu_custom_call.1} parent=1 // pred_check_branch
      %87 = sbr.rel (0) target = $region25
    $region24: #{tpu_custom_call.1} parent=1 // pred_region
      %88 = dma.done [#allocation4], 32
    $region25: #{tpu_custom_call.1} parent=1 // pred_fallthru
      _
    %89 = vsyncpa [#allocation3], 1
    %90 = vsyncpa [#allocation4], 1

</llo_original>
